<compile_context>
chip_gen: v7x
topology: tpu7x:2x2x1
jax: 0.10.0
libtpu: 0.0.40
codegen_flags: <defaults>
</compile_context>

<pallas_src>
import functools

import jax
import jax.numpy as jnp
from jax import lax
from jax.experimental import pallas as pl
from jax.experimental.pallas import tpu as pltpu
import numpy as np

LANES = 128


def _dl_kernel(c1, c2, x_ref, w_ref, b_ref, o_ref):
    f32 = jnp.float32

    def pool_pair_max(z, step):
        # lane k <- max(z[:, k], z[:, k+step])  (wrap-around / odd-position lanes are
        # dead: the next weight slab has zero rows there, so only even-position lane
        # groups — the true MaxPool(2) outputs — ever contribute downstream).
        zs = jnp.concatenate([z[:, step:], z[:, :step]], axis=1)
        return jnp.maximum(z, zs)

    z = x_ref[...]                                                    # (bblk, 128)
    # conv1 (all output positions via Toeplitz weight, MXU) -> maxpool(2) -> +b -> relu
    z = jnp.dot(z, w_ref[0], preferred_element_type=f32)
    z = jnp.maximum(pool_pair_max(z, c1) + b_ref[0:1, :], 0.0)
    # conv2 (single Toeplitz matmul, no broadcast / batched einsum) -> pool -> +b -> relu
    z = jnp.dot(z, w_ref[1], preferred_element_type=f32)
    z = jnp.maximum(pool_pair_max(z, c2) + b_ref[1:2, :], 0.0)
    # lin1: torch flatten order and pooled-lane selection are folded into w_ref[2]
    z = jnp.maximum(jnp.dot(z, w_ref[2], preferred_element_type=f32) + b_ref[2:3, :], 0.0)
    # TODO(synk): F.dropout with p>0 not implemented; module defaults drop1=drop2=0 -> identity.
    # lin2
    z = jnp.maximum(jnp.dot(z, w_ref[3], preferred_element_type=f32) + b_ref[3:4, :], 0.0)
    # lin3 (lane-dense store; valid result in lanes [0, n_out))
    o_ref[...] = jnp.dot(z, w_ref[4], preferred_element_type=f32) + b_ref[4:5, :]


def dl_forward_pallas(x, params):
    (w1t, b1t, w2t_conv, b2t, W1, bl1, W2, bl2, W3, bl3) = params
    # torch shapes: w1t (C1,1,k1), w2t_conv (C2,C1,k2), W* (out,in), b* (out,)
    f32 = jnp.float32
    B, n_inp = x.shape
    C1, _, k1 = w1t.shape
    C2, _, k2 = w2t_conv.shape
    L1 = n_inp + k1 - 1          # conv1 output length (padding = k1-1)
    P1 = L1 // 2                 # after maxpool(2)
    L2 = P1 + k2 - 1             # conv2 output length (padding = k2-1)
    P2 = L2 // 2
    l_1 = W1.shape[0]
    l_2 = W2.shape[0]
    n_out = W3.shape[0]

    # This packing keeps every per-sample activation row inside one 128-lane vreg row.
    assert max(n_inp, L1 * C1, L2 * C2, l_1, l_2, n_out) <= LANES, (
        "activation row exceeds 128 lanes; packing assumes small DL configurations")
    assert W1.shape[1] == C2 * P2

    def pad2d(a):
        r, c = a.shape
        return jnp.pad(a.astype(f32), ((0, LANES - r), (0, LANES - c)))

    def pad1d(v):
        return jnp.pad(v.astype(f32), (0, LANES - v.shape[0]))

    # ---- conv1 as Toeplitz matmul: column t*C1+c reads raw x[t+j-(k1-1)] * w1[c,0,j]
    rs, cs, ic, ij = [], [], [], []
    for t in range(L1):
        for j in range(k1):
            src = t + j - (k1 - 1)
            if 0 <= src < n_inp:
                for c in range(C1):
                    rs.append(src); cs.append(t * C1 + c); ic.append(c); ij.append(j)
    w1toep = jnp.zeros((LANES, LANES), f32).at[np.array(rs), np.array(cs)].set(
        w1t[np.array(ic), 0, np.array(ij)].astype(f32))

    # ---- conv2 as Toeplitz matmul over the pooled stage-1 lanes: valid h1 values live
    #      at lanes (2p)*C1+c; all other rows stay zero (dead lanes never contribute).
    rs, cs, io, ic, ij = [], [], [], [], []
    for t in range(L2):
        for j in range(k2):
            p = t + j - (k2 - 1)          # zero padding handled by simply omitting rows
            if 0 <= p < P1:
                for co in range(C2):
                    for c in range(C1):
                        rs.append(2 * p * C1 + c); cs.append(t * C2 + co)
                        io.append(co); ic.append(c); ij.append(j)
    w2toep = jnp.zeros((LANES, LANES), f32).at[np.array(rs), np.array(cs)].set(
        w2t_conv[np.array(io), np.array(ic), np.array(ij)].astype(f32))

    # ---- lin1 with flatten fused: row (2p)*C2+co <- W1[o, co*P2+p]  (torch flattens
    #      the (C2, P2) feature map channel-major); dead rows stay zero.
    rs, cs, ro, rf = [], [], [], []
    for p in range(P2):
        for co in range(C2):
            for o in range(l_1):
                rs.append(2 * p * C2 + co); cs.append(o)
                ro.append(o); rf.append(co * P2 + p)
    w1big = jnp.zeros((LANES, LANES), f32).at[np.array(rs), np.array(cs)].set(
        W1[np.array(ro), np.array(rf)].astype(f32))

    # One packed weight slab (1 DMA) and one packed bias slab (1 DMA).
    wpack = jnp.stack([w1toep, w2toep, w1big, pad2d(W2.T), pad2d(W3.T)])     # (5,128,128)
    zero = jnp.zeros((LANES,), f32)
    biases = jnp.stack([
        pad1d(jnp.tile(b1t.astype(f32), L1)),     # lane t*C1+c  = b1[c]
        pad1d(jnp.tile(b2t.astype(f32), L2)),     # lane t*C2+co = b2[co]
        pad1d(bl1), pad1d(bl2), pad1d(bl3),
        zero, zero, zero,
    ])                                            # (8, 128)

    # Batch padded to a multiple of the row block so every load/store is (8,128)-dense;
    # the batch grid axis is "parallel" (megacore / v7x 2-TC sharding for large B).
    Bp = ((B + 7) // 8) * 8
    bblk = min(128, Bp)
    Bp = ((Bp + bblk - 1) // bblk) * bblk
    xp = jnp.zeros((Bp, LANES), f32).at[:B, :n_inp].set(x.astype(f32))

    kernel = functools.partial(_dl_kernel, int(C1), int(C2))
    out = pl.pallas_call(
        kernel,
        out_shape=jax.ShapeDtypeStruct((Bp, LANES), f32),
        grid=(Bp // bblk,),
        in_specs=[
            pl.BlockSpec((bblk, LANES), lambda i: (i, 0)),
            pl.BlockSpec((5, LANES, LANES), lambda i: (0, 0, 0)),
            pl.BlockSpec((8, LANES), lambda i: (0, 0)),
        ],
        out_specs=pl.BlockSpec((bblk, LANES), lambda i: (i, 0)),
        compiler_params=pltpu.CompilerParams(dimension_semantics=("parallel",)),
    )(xp, wpack, biases)
    return out[:B, :n_out]


def dl_forward_ref(x, params):
    """Pure-JAX reference matching the PyTorch forward semantics (eval, dropout p=0)."""
    (w1t, b1t, w2t_conv, b2t, W1, bl1, W2, bl2, W3, bl3) = params
    B = x.shape[0]
    k1 = w1t.shape[2]
    k2 = w2t_conv.shape[2]
    xr = x[:, None, :]
    c1 = lax.conv_general_dilated(xr, w1t, (1,), [(k1 - 1, k1 - 1)],
                                  dimension_numbers=('NCH', 'OIH', 'NCH')) + b1t[None, :, None]
    P1 = c1.shape[2] // 2
    h1 = jax.nn.relu(jnp.max(c1[:, :, :2 * P1].reshape(B, c1.shape[1], P1, 2), axis=3))
    c2 = lax.conv_general_dilated(h1, w2t_conv, (1,), [(k2 - 1, k2 - 1)],
                                  dimension_numbers=('NCH', 'OIH', 'NCH')) + b2t[None, :, None]
    P2 = c2.shape[2] // 2
    h2 = jax.nn.relu(jnp.max(c2[:, :, :2 * P2].reshape(B, c2.shape[1], P2, 2), axis=3))
    flat = h2.reshape(B, -1)
    y1 = jax.nn.relu(flat @ W1.T + bl1)
    y2 = jax.nn.relu(y1 @ W2.T + bl2)
    return y2 @ W3.T + bl3


if __name__ == "__main__":
    # DL(n_inp=16, l_1=32, l_2=16, conv1_out=4, conv1_kernel=3, conv2_kernel=3, n_out=1)
    B = 2
    n_inp = 16
    conv1_out, conv1_kernel, conv2_kernel = 4, 3, 3
    l_1, l_2, n_out = 32, 16, 1
    C1, C2 = conv1_out, conv1_out * 2
    L1 = n_inp + conv1_kernel - 1
    P1 = L1 // 2
    L2 = P1 + conv2_kernel - 1
    P2 = L2 // 2
    n_feat = C2 * P2                      # = 40 for this config

    key = jax.random.PRNGKey(0)
    kx, kp = jax.random.split(key)
    x = jax.random.normal(kx, (B, n_inp), dtype=jnp.float32)

    ks = jax.random.split(kp, 10)
    init = lambda k, shape, s: s * jax.random.normal(k, shape, dtype=jnp.float32)
    w1t = init(ks[0], (C1, 1, conv1_kernel), 0.3)
    b1t = init(ks[1], (C1,), 0.1)
    w2t = init(ks[2], (C2, C1, conv2_kernel), 0.2)
    b2t = init(ks[3], (C2,), 0.1)
    W1 = init(ks[4], (l_1, n_feat), 0.15)
    bl1 = init(ks[5], (l_1,), 0.1)
    W2 = init(ks[6], (l_2, l_1), 0.15)
    bl2 = init(ks[7], (l_2,), 0.1)
    W3 = init(ks[8], (n_out, l_2), 0.15)
    bl3 = init(ks[9], (n_out,), 0.1)
    params = (w1t, b1t, w2t, b2t, W1, bl1, W2, bl2, W3, bl3)

    y = jax.block_until_ready(dl_forward_pallas(x, params))
    y_ref = dl_forward_ref(x, params)
    assert y.shape == (B, n_out)
    np.testing.assert_allclose(np.asarray(y), np.asarray(y_ref), rtol=1e-4, atol=1e-4)
    print("KERNEL_OK")
</pallas_src>

<mosaic_0001>
module attributes {stable_mosaic.version = 11 : i64} {
  func.func @_dl_kernel(%arg0: i32, %arg1: memref<8x128xf32, #tpu.memory_space<vmem>>, %arg2: memref<5x128x128xf32, #tpu.memory_space<vmem>>, %arg3: memref<8x128xf32, #tpu.memory_space<vmem>>, %arg4: memref<8x128xf32, #tpu.memory_space<vmem>>) attributes {dimension_semantics = [#tpu.dimension_semantics<parallel>], iteration_bounds = array<i64: 1>, scalar_prefetch = 0 : i64, scratch_operands = 0 : i64, tpu.core_type = #tpu.core_type<tc>, window_params = [{transform_indices = @transform_0, window_bounds = array<i64: 8, 128>}, {pipeline_mode = #tpu.pipeline_mode<synchronous>, transform_indices = @transform_1, window_bounds = array<i64: 5, 128, 128>}, {pipeline_mode = #tpu.pipeline_mode<synchronous>, transform_indices = @transform_2, window_bounds = array<i64: 8, 128>}, {transform_indices = @transform_3, window_bounds = array<i64: 8, 128>}]} {
    %c0 = arith.constant 0 : index
    %c0_0 = arith.constant 0 : index
    %0 = vector.load %arg1[%c0, %c0_0] : memref<8x128xf32, #tpu.memory_space<vmem>>, vector<8x128xf32>
    %c0_1 = arith.constant 0 : index
    %c0_2 = arith.constant 0 : index
    %c0_3 = arith.constant 0 : index
    %1 = vector.load %arg2[%c0_1, %c0_2, %c0_3] : memref<5x128x128xf32, #tpu.memory_space<vmem>>, vector<1x128x128xf32>
    %2 = vector.shape_cast %1 : vector<1x128x128xf32> to vector<128x128xf32>
    %cst = arith.constant dense<0.000000e+00> : vector<8x128xf32>
    %3 = tpu.matmul %0, %2, %cst {dimension_numbers = #tpu.dot_dimension_numbers<[1], [0], [0], [1], [0, 0, 1, 1], [], []>} : vector<8x128xf32>, vector<128x128xf32>, vector<8x128xf32> -> vector<8x128xf32>
    %4 = vector.extract_strided_slice %3 {offsets = [0, 4], sizes = [8, 124], strides = [1, 1]} : vector<8x128xf32> to vector<8x124xf32>
    %5 = vector.extract_strided_slice %3 {offsets = [0, 0], sizes = [8, 4], strides = [1, 1]} : vector<8x128xf32> to vector<8x4xf32>
    %6 = tpu.concatenate %4, %5 in 1 : vector<8x124xf32>, vector<8x4xf32> -> vector<8x128xf32>
    %7 = arith.maximumf %3, %6 : vector<8x128xf32>
    %c0_4 = arith.constant 0 : index
    %c0_5 = arith.constant 0 : index
    %8 = vector.load %arg3[%c0_4, %c0_5] : memref<8x128xf32, #tpu.memory_space<vmem>>, vector<1x128xf32>
    %9 = vector.broadcast %8 : vector<1x128xf32> to vector<8x128xf32>
    %10 = arith.addf %7, %9 : vector<8x128xf32>
    %cst_6 = arith.constant 0.000000e+00 : f32
    %11 = vector.broadcast %cst_6 : f32 to vector<8x128xf32>
    %12 = arith.maximumf %10, %11 : vector<8x128xf32>
    %c1 = arith.constant 1 : index
    %c0_7 = arith.constant 0 : index
    %c0_8 = arith.constant 0 : index
    %13 = vector.load %arg2[%c1, %c0_7, %c0_8] : memref<5x128x128xf32, #tpu.memory_space<vmem>>, vector<1x128x128xf32>
    %14 = vector.shape_cast %13 : vector<1x128x128xf32> to vector<128x128xf32>
    %cst_9 = arith.constant dense<0.000000e+00> : vector<8x128xf32>
    %15 = tpu.matmul %12, %14, %cst_9 {dimension_numbers = #tpu.dot_dimension_numbers<[1], [0], [0], [1], [0, 0, 1, 1], [], []>} : vector<8x128xf32>, vector<128x128xf32>, vector<8x128xf32> -> vector<8x128xf32>
    %16 = vector.extract_strided_slice %15 {offsets = [0, 8], sizes = [8, 120], strides = [1, 1]} : vector<8x128xf32> to vector<8x120xf32>
    %17 = vector.extract_strided_slice %15 {offsets = [0, 0], sizes = [8, 8], strides = [1, 1]} : vector<8x128xf32> to vector<8x8xf32>
    %18 = tpu.concatenate %16, %17 in 1 : vector<8x120xf32>, vector<8x8xf32> -> vector<8x128xf32>
    %19 = arith.maximumf %15, %18 : vector<8x128xf32>
    %c1_10 = arith.constant 1 : index
    %c0_11 = arith.constant 0 : index
    %20 = vector.load %arg3[%c1_10, %c0_11] : memref<8x128xf32, #tpu.memory_space<vmem>>, vector<1x128xf32>
    %21 = vector.broadcast %20 : vector<1x128xf32> to vector<8x128xf32>
    %22 = arith.addf %19, %21 : vector<8x128xf32>
    %cst_12 = arith.constant 0.000000e+00 : f32
    %23 = vector.broadcast %cst_12 : f32 to vector<8x128xf32>
    %24 = arith.maximumf %22, %23 : vector<8x128xf32>
    %c2 = arith.constant 2 : index
    %c0_13 = arith.constant 0 : index
    %c0_14 = arith.constant 0 : index
    %25 = vector.load %arg2[%c2, %c0_13, %c0_14] : memref<5x128x128xf32, #tpu.memory_space<vmem>>, vector<1x128x128xf32>
    %26 = vector.shape_cast %25 : vector<1x128x128xf32> to vector<128x128xf32>
    %cst_15 = arith.constant dense<0.000000e+00> : vector<8x128xf32>
    %27 = tpu.matmul %24, %26, %cst_15 {dimension_numbers = #tpu.dot_dimension_numbers<[1], [0], [0], [1], [0, 0, 1, 1], [], []>} : vector<8x128xf32>, vector<128x128xf32>, vector<8x128xf32> -> vector<8x128xf32>
    %c2_16 = arith.constant 2 : index
    %c0_17 = arith.constant 0 : index
    %28 = vector.load %arg3[%c2_16, %c0_17] : memref<8x128xf32, #tpu.memory_space<vmem>>, vector<1x128xf32>
    %29 = vector.broadcast %28 : vector<1x128xf32> to vector<8x128xf32>
    %30 = arith.addf %27, %29 : vector<8x128xf32>
    %cst_18 = arith.constant 0.000000e+00 : f32
    %31 = vector.broadcast %cst_18 : f32 to vector<8x128xf32>
    %32 = arith.maximumf %30, %31 : vector<8x128xf32>
    %c3 = arith.constant 3 : index
    %c0_19 = arith.constant 0 : index
    %c0_20 = arith.constant 0 : index
    %33 = vector.load %arg2[%c3, %c0_19, %c0_20] : memref<5x128x128xf32, #tpu.memory_space<vmem>>, vector<1x128x128xf32>
    %34 = vector.shape_cast %33 : vector<1x128x128xf32> to vector<128x128xf32>
    %cst_21 = arith.constant dense<0.000000e+00> : vector<8x128xf32>
    %35 = tpu.matmul %32, %34, %cst_21 {dimension_numbers = #tpu.dot_dimension_numbers<[1], [0], [0], [1], [0, 0, 1, 1], [], []>} : vector<8x128xf32>, vector<128x128xf32>, vector<8x128xf32> -> vector<8x128xf32>
    %c3_22 = arith.constant 3 : index
    %c0_23 = arith.constant 0 : index
    %36 = vector.load %arg3[%c3_22, %c0_23] : memref<8x128xf32, #tpu.memory_space<vmem>>, vector<1x128xf32>
    %37 = vector.broadcast %36 : vector<1x128xf32> to vector<8x128xf32>
    %38 = arith.addf %35, %37 : vector<8x128xf32>
    %cst_24 = arith.constant 0.000000e+00 : f32
    %39 = vector.broadcast %cst_24 : f32 to vector<8x128xf32>
    %40 = arith.maximumf %38, %39 : vector<8x128xf32>
    %c4 = arith.constant 4 : index
    %c0_25 = arith.constant 0 : index
    %c0_26 = arith.constant 0 : index
    %41 = vector.load %arg2[%c4, %c0_25, %c0_26] : memref<5x128x128xf32, #tpu.memory_space<vmem>>, vector<1x128x128xf32>
    %42 = vector.shape_cast %41 : vector<1x128x128xf32> to vector<128x128xf32>
    %cst_27 = arith.constant dense<0.000000e+00> : vector<8x128xf32>
    %43 = tpu.matmul %40, %42, %cst_27 {dimension_numbers = #tpu.dot_dimension_numbers<[1], [0], [0], [1], [0, 0, 1, 1], [], []>} : vector<8x128xf32>, vector<128x128xf32>, vector<8x128xf32> -> vector<8x128xf32>
    %c4_28 = arith.constant 4 : index
    %c0_29 = arith.constant 0 : index
    %44 = vector.load %arg3[%c4_28, %c0_29] : memref<8x128xf32, #tpu.memory_space<vmem>>, vector<1x128xf32>
    %45 = vector.broadcast %44 : vector<1x128xf32> to vector<8x128xf32>
    %46 = arith.addf %43, %45 : vector<8x128xf32>
    %c0_30 = arith.constant 0 : index
    %c0_31 = arith.constant 0 : index
    %47 = vector.load %arg4[%c0_30, %c0_31] : memref<8x128xf32, #tpu.memory_space<vmem>>, vector<8x128xf32>
    tpu.vector_store %arg4[%c0_30, %c0_31], %46 {strides = array<i32>} : memref<8x128xf32, #tpu.memory_space<vmem>>, vector<8x128xf32>,
    return
  }
  func.func @transform_0(%arg0: i32) -> (i32, i32) {
    %c0_i32 = arith.constant 0 : i32
    %c0_i32_0 = arith.constant 0 : i32
    return %arg0, %c0_i32 : i32, i32
  }
  func.func @transform_1(%arg0: i32) -> (i32, i32, i32) {
    %c0_i32 = arith.constant 0 : i32
    %c0_i32_0 = arith.constant 0 : i32
    %c0_i32_1 = arith.constant 0 : i32
    %c0_i32_2 = arith.constant 0 : i32
    return %c0_i32, %c0_i32_0, %c0_i32_1 : i32, i32, i32
  }
  func.func @transform_2(%arg0: i32) -> (i32, i32) {
    %c0_i32 = arith.constant 0 : i32
    %c0_i32_0 = arith.constant 0 : i32
    %c0_i32_1 = arith.constant 0 : i32
    return %c0_i32, %c0_i32_0 : i32, i32
  }
  func.func @transform_3(%arg0: i32) -> (i32, i32) {
    %c0_i32 = arith.constant 0 : i32
    %c0_i32_0 = arith.constant 0 : i32
    return %arg0, %c0_i32 : i32, i32
  }
}

</mosaic_0001>

<llo_original>
// kernel: tpu_custom_call.1
$region0: #{tpu_custom_call.1}
  #allocation0 [shape = 'u32[]', space=smem, size = 0x4, offset = 0x4, fixed_abs, tag = 'smem constant byte address 0x4 - core index']
  #allocation1 [shape = 'u32[144,128]{1,0:T(1,128)}', space=vmem, size = 0x12000, scoped, tag = 'internal scratch']
  %s0 = inlined_call_operand.hbm [shape: f32[8,128], index: 0, kind: input, shape index: {}]
  %s1 = inlined_call_operand.hbm [shape: f32[5,128,128], index: 1, kind: input, shape index: {}]
  %s2 = inlined_call_operand.hbm [shape: f32[8,128], index: 2, kind: input, shape index: {}]
  %s3 = inlined_call_operand.hbm [shape: f32[8,128], index: 3, kind: output, shape index: {}]
  %s4 = sld [smem:[#allocation0]]
  $region34: #{tpu_custom_call.1} parent=0
    _
  %s6 = ssub.s32 1, %s4
  %s7 = scalar_select 0, %s6, %s4
  $region1: #{tpu_custom_call.1} parent=0
    #allocation2 [shape = 'u8[4096]{0}', space=vmem, size = 0x1000, scoped, tag = 'input window, operand 0, single buffered']
    #allocation3 [shape = 's32[1]{0}', space=sflag, size = 0x4, scoped, tag = 'scoped memory for tpu_custom_call.1']
    #allocation4 [shape = 's32[1]{0}', space=sflag, size = 0x4, scoped, tag = 'scoped memory for tpu_custom_call.1']
    #allocation5 [shape = 'u8[327680]{0}', space=vmem, size = 0x50000, scoped, tag = 'input window, operand 1, single buffered']
    #allocation6 [shape = 's32[1]{0}', space=sflag, size = 0x4, scoped, tag = 'scoped memory for tpu_custom_call.1']
    #allocation7 [shape = 'u8[4096]{0}', space=vmem, size = 0x1000, scoped, tag = 'input window, operand 2, single buffered']
    #allocation8 [shape = 'u8[4096]{0}', space=vmem, size = 0x1000, scoped, tag = 'output window, operand 0, single buffered']
    %8 = vsyncpa [#allocation3], 0
    %9 = vsyncpa [#allocation6], 0
    %10 = vsyncpa [#allocation4], 0
    // Predicated region
    $region2: #{tpu_custom_call.1} parent=1 // pred_check
      _
    $region3: #{tpu_custom_call.1} parent=1 // pred_check_branch
      %12 = sbr.rel (0) target = $region5
    $region4: #{tpu_custom_call.1} parent=1 // pred_region
      %s14 = ssub.s32 128, 128
      %15 = vsyncadd [#allocation3], %s14
      %s17 = sshll.u32 [#allocation2], 4
      %s18 = int_to_ptr.vmem [resolvable:$true] %s17
      %20 = dma.hbm_to_vmem [thread:$0]  %s0, 128, %s18, [#allocation3]
    $region5: #{tpu_custom_call.1} parent=1 // pred_fallthru
      _
    // Predicated region
    $region6: #{tpu_custom_call.1} parent=1 // pred_check
      _
    $region7: #{tpu_custom_call.1} parent=1 // pred_check_branch
      %22 = sbr.rel (0) target = $region9
    $region8: #{tpu_custom_call.1} parent=1 // pred_region
      %s24 = ssub.s32 10240, 10240
      %25 = vsyncadd [#allocation6], %s24
      %s26 = sshll.u32 [#allocation5], 4
      %s27 = int_to_ptr.vmem [resolvable:$true] %s26
      %32 = dma.hbm_to_vmem [thread:$0]  %s1, 10240, %s27, [#allocation6], 128, 128, 8
    $region9: #{tpu_custom_call.1} parent=1 // pred_fallthru
      _
    // Predicated region
    $region10: #{tpu_custom_call.1} parent=1 // pred_check
      _
    $region11: #{tpu_custom_call.1} parent=1 // pred_check_branch
      %34 = sbr.rel (0) target = $region13
    $region12: #{tpu_custom_call.1} parent=1 // pred_region
      %s36 = ssub.s32 128, 128
      %37 = vsyncadd [#allocation6], %s36
      %s39 = sshll.u32 [#allocation7], 4
      %s40 = int_to_ptr.vmem [resolvable:$true] %s39
      %42 = dma.hbm_to_vmem [thread:$0]  %s2, 128, %s40, [#allocation6]
    $region13: #{tpu_custom_call.1} parent=1 // pred_fallthru
      _
    // Predicated region
    $region14: #{tpu_custom_call.1} parent=1 // pred_check
      _
    $region15: #{tpu_custom_call.1} parent=1 // pred_check_branch
      %44 = sbr.rel (0) target = $region17
    $region16: #{tpu_custom_call.1} parent=1 // pred_region
      %45 = dma.done [#allocation3], 128
    $region17: #{tpu_custom_call.1} parent=1 // pred_fallthru
      _
    // Predicated region
    $region18: #{tpu_custom_call.1} parent=1 // pred_check
      _
    $region19: #{tpu_custom_call.1} parent=1 // pred_check_branch
      %47 = sbr.rel (0) target = $region21
    $region20: #{tpu_custom_call.1} parent=1 // pred_region
      %48 = dma.done [#allocation6], 10240
    $region21: #{tpu_custom_call.1} parent=1 // pred_fallthru
      _
    // Predicated region
    $region22: #{tpu_custom_call.1} parent=1 // pred_check
      _
    $region23: #{tpu_custom_call.1} parent=1 // pred_check_branch
      %50 = sbr.rel (0) target = $region25
    $region24: #{tpu_custom_call.1} parent=1 // pred_region
      %51 = dma.done [#allocation6], 128
    $region25: #{tpu_custom_call.1} parent=1 // pred_fallthru
      _
    %v52 = vld [vmem:[#allocation2] sm:$0xff]
    %v53 = vld [vmem:[#allocation5] sm:$0xff]
    %v54 = vld [vmem:[#allocation5 + $0x8] sm:$0xff]
    %v55 = vld [vmem:[#allocation5 + $0x10] sm:$0xff]
    %v56 = vld [vmem:[#allocation5 + $0x18] sm:$0xff]
    %v57 = vld [vmem:[#allocation5 + $0x20] sm:$0xff]
    %v58 = vld [vmem:[#allocation5 + $0x28] sm:$0xff]
    %v59 = vld [vmem:[#allocation5 + $0x30] sm:$0xff]
    %v60 = vld [vmem:[#allocation5 + $0x38] sm:$0xff]
    %v61 = vld [vmem:[#allocation5 + $0x40] sm:$0xff]
    %v62 = vld [vmem:[#allocation5 + $0x48] sm:$0xff]
    %v63 = vld [vmem:[#allocation5 + $0x50] sm:$0xff]
    %v64 = vld [vmem:[#allocation5 + $0x58] sm:$0xff]
    %v65 = vld [vmem:[#allocation5 + $0x60] sm:$0xff]
    %v66 = vld [vmem:[#allocation5 + $0x68] sm:$0xff]
    %v67 = vld [vmem:[#allocation5 + $0x70] sm:$0xff]
    %v68 = vld [vmem:[#allocation5 + $0x78] sm:$0xff]
    %69 = vmatprep.subr.mxu0 0.0
    %70 = vmatpush1.msra.mxu0 %v53
    %71 = vmatprep.subr.mxu0 0.0
    %72 = vmatpush1.msra.mxu0 %v54
    %73 = vmatprep.subr.mxu0 0.0
    %74 = vmatpush1.msra.mxu0 %v55
    %75 = vmatprep.subr.mxu0 0.0
    %76 = vmatpush1.msra.mxu0 %v56
    %77 = vmatprep.subr.mxu0 0.0
    %78 = vmatpush1.msra.mxu0 %v57
    %79 = vmatprep.subr.mxu0 0.0
    %80 = vmatpush1.msra.mxu0 %v58
    %81 = vmatprep.subr.mxu0 0.0
    %82 = vmatpush1.msra.mxu0 %v59
    %83 = vmatprep.subr.mxu0 0.0
    %84 = vmatpush1.msra.mxu0 %v60
    %85 = vmatprep.subr.mxu0 0.0
    %86 = vmatpush1.msra.mxu0 %v61
    %87 = vmatprep.subr.mxu0 0.0
    %88 = vmatpush1.msra.mxu0 %v62
    %89 = vmatprep.subr.mxu0 0.0
    %90 = vmatpush1.msra.mxu0 %v63
    %91 = vmatprep.subr.mxu0 0.0
    %92 = vmatpush1.msra.mxu0 %v64
    %93 = vmatprep.subr.mxu0 0.0
    %94 = vmatpush1.msra.mxu0 %v65
    %95 = vmatprep.subr.mxu0 0.0
    %96 = vmatpush1.msra.mxu0 %v66
    %97 = vmatprep.subr.mxu0 0.0
    %98 = vmatpush1.msra.mxu0 %v67
    %99 = vmatprep.subr.mxu0 0.0
    %100 = vmatpush1.msra.mxu0 %v68
    %101 = vmatprep.subr.mxu0 0.0
    %102 = vmatpush1.msra.mxu0 0.0
    %103 = vmatprep.subr.mxu0 0.0
    %104 = vmatpush1.msra.mxu0 0.0
    %105 = vmatprep.subr.mxu0 0.0
    %106 = vmatpush1.msra.mxu0 0.0
    %107 = vmatprep.subr.mxu0 0.0
    %108 = vmatpush1.msra.mxu0 0.0
    %109 = vmatprep.subr.mxu0 0.0
    %110 = vmatpush1.msra.mxu0 0.0
    %111 = vmatprep.subr.mxu0 0.0
    %112 = vmatpush1.msra.mxu0 0.0
    %113 = vmatprep.subr.mxu0 0.0
    %114 = vmatpush1.msra.mxu0 0.0
    %115 = vmatprep.subr.mxu0 0.0
    %116 = vmatpush1.msra.mxu0 0.0
    %117 = vmatprep.subr.mxu0 0.0
    %118 = vmatpush1.msra.mxu0 0.0
    %119 = vmatprep.subr.mxu0 0.0
    %120 = vmatpush1.msra.mxu0 0.0
    %121 = vmatprep.subr.mxu0 0.0
    %122 = vmatpush1.msra.mxu0 0.0
    %123 = vmatprep.subr.mxu0 0.0
    %124 = vmatpush1.msra.mxu0 0.0
    %125 = vmatprep.subr.mxu0 0.0
    %126 = vmatpush1.msra.mxu0 0.0
    %127 = vmatprep.subr.mxu0 0.0
    %128 = vmatpush1.msra.mxu0 0.0
    %129 = vmatprep.subr.mxu0 0.0
    %130 = vmatpush1.msra.mxu0 0.0
    %131 = vmatprep.subr.mxu0 0.0
    %132 = vmatpush1.msra.mxu0 0.0
    %133 = vmatprep.mubr.f32.mxu0 0.0
    %134 = vmatmul.mubr.f32.gmra.mrb[0].mxu0 %v52
    %v135 = vpop.f32.mrb[0].mxu0
    %v136 = vadd.f32 0.0, %v135
    %v137 = vpop.f32.mrb[0].mxu0
    %138 = vdwg.mxu0
    %140 = vrot.lane.b32.xlu0 %v136, 124
    %v141 = vpop.permute.xlu0 %140
    %v143 = vmax.f32 %v136, %v141
    %v144 = vld [vmem:[#allocation7] sm:$0x1]
    %v145 = vlaneseq
    %v146 = vshrl.u32 %v145, 7
    %v147 = vsub.s32 0, %v146
    %v148 = vrot.slane %v144, %v147
    %v149 = vadd.f32 %v143, %v148
    %v150 = vmax.f32 %v149, 0.0
    %s151 = scalar_lea.vmem [#allocation5], 128
    %v152 = vld [vmem:[%s151] sm:$0xff]
    %v153 = vld [vmem:[%s151 + $0x8] sm:$0xff]
    %v154 = vld [vmem:[%s151 + $0x10] sm:$0xff]
    %v155 = vld [vmem:[%s151 + $0x18] sm:$0xff]
    %v156 = vld [vmem:[%s151 + $0x20] sm:$0xff]
    %v157 = vld [vmem:[%s151 + $0x28] sm:$0xff]
    %v158 = vld [vmem:[%s151 + $0x30] sm:$0xff]
    %v159 = vld [vmem:[%s151 + $0x38] sm:$0xff]
    %v160 = vld [vmem:[%s151 + $0x40] sm:$0xff]
    %v161 = vld [vmem:[%s151 + $0x48] sm:$0xff]
    %v162 = vld [vmem:[%s151 + $0x50] sm:$0xff]
    %v163 = vld [vmem:[%s151 + $0x58] sm:$0xff]
    %v164 = vld [vmem:[%s151 + $0x60] sm:$0xff]
    %v165 = vld [vmem:[%s151 + $0x68] sm:$0xff]
    %v166 = vld [vmem:[%s151 + $0x70] sm:$0xff]
    %v167 = vld [vmem:[%s151 + $0x78] sm:$0xff]
    %168 = vmatprep.subr.mxu0 0.0
    %169 = vmatpush1.msra.mxu0 %v152
    %170 = vmatprep.subr.mxu0 0.0
    %171 = vmatpush1.msra.mxu0 %v153
    %172 = vmatprep.subr.mxu0 0.0
    %173 = vmatpush1.msra.mxu0 %v154
    %174 = vmatprep.subr.mxu0 0.0
    %175 = vmatpush1.msra.mxu0 %v155
    %176 = vmatprep.subr.mxu0 0.0
    %177 = vmatpush1.msra.mxu0 %v156
    %178 = vmatprep.subr.mxu0 0.0
    %179 = vmatpush1.msra.mxu0 %v157
    %180 = vmatprep.subr.mxu0 0.0
    %181 = vmatpush1.msra.mxu0 %v158
    %182 = vmatprep.subr.mxu0 0.0
    %183 = vmatpush1.msra.mxu0 %v159
    %184 = vmatprep.subr.mxu0 0.0
    %185 = vmatpush1.msra.mxu0 %v160
    %186 = vmatprep.subr.mxu0 0.0
    %187 = vmatpush1.msra.mxu0 %v161
    %188 = vmatprep.subr.mxu0 0.0
    %189 = vmatpush1.msra.mxu0 %v162
    %190 = vmatprep.subr.mxu0 0.0
    %191 = vmatpush1.msra.mxu0 %v163
    %192 = vmatprep.subr.mxu0 0.0
    %193 = vmatpush1.msra.mxu0 %v164
    %194 = vmatprep.subr.mxu0 0.0
    %195 = vmatpush1.msra.mxu0 %v165
    %196 = vmatprep.subr.mxu0 0.0
    %197 = vmatpush1.msra.mxu0 %v166
    %198 = vmatprep.subr.mxu0 0.0
    %199 = vmatpush1.msra.mxu0 %v167
    %200 = vmatprep.subr.mxu0 0.0
    %201 = vmatpush1.msra.mxu0 0.0
    %202 = vmatprep.subr.mxu0 0.0
    %203 = vmatpush1.msra.mxu0 0.0
    %204 = vmatprep.subr.mxu0 0.0
    %205 = vmatpush1.msra.mxu0 0.0
    %206 = vmatprep.subr.mxu0 0.0
    %207 = vmatpush1.msra.mxu0 0.0
    %208 = vmatprep.subr.mxu0 0.0
    %209 = vmatpush1.msra.mxu0 0.0
    %210 = vmatprep.subr.mxu0 0.0
    %211 = vmatpush1.msra.mxu0 0.0
    %212 = vmatprep.subr.mxu0 0.0
    %213 = vmatpush1.msra.mxu0 0.0
    %214 = vmatprep.subr.mxu0 0.0
    %215 = vmatpush1.msra.mxu0 0.0
    %216 = vmatprep.subr.mxu0 0.0
    %217 = vmatpush1.msra.mxu0 0.0
    %218 = vmatprep.subr.mxu0 0.0
    %219 = vmatpush1.msra.mxu0 0.0
    %220 = vmatprep.subr.mxu0 0.0
    %221 = vmatpush1.msra.mxu0 0.0
    %222 = vmatprep.subr.mxu0 0.0
    %223 = vmatpush1.msra.mxu0 0.0
    %224 = vmatprep.subr.mxu0 0.0
    %225 = vmatpush1.msra.mxu0 0.0
    %226 = vmatprep.subr.mxu0 0.0
    %227 = vmatpush1.msra.mxu0 0.0
    %228 = vmatprep.subr.mxu0 0.0
    %229 = vmatpush1.msra.mxu0 0.0
    %230 = vmatprep.subr.mxu0 0.0
    %231 = vmatpush1.msra.mxu0 0.0
    %232 = vmatprep.mubr.f32.mxu0 0.0
    %233 = vmatmul.mubr.f32.gmra.mrb[0].mxu0 %v150
    %v234 = vpop.f32.mrb[0].mxu0
    %v235 = vadd.f32 0.0, %v234
    %v236 = vpop.f32.mrb[0].mxu0
    %237 = vdwg.mxu0
    %239 = vrot.lane.b32.xlu0 %v235, 120
    %v240 = vpop.permute.xlu0 %239
    %v242 = vmax.f32 %v235, %v240
    %v243 = vld [vmem:[#allocation7 + $0x1] sm:$0x1]
    %v244 = vlaneseq
    %v245 = vshrl.u32 %v244, 7
    %v246 = vsub.s32 0, %v245
    %v247 = vrot.slane %v243, %v246
    %v248 = vadd.f32 %v242, %v247
    %v249 = vmax.f32 %v248, 0.0
    %s250 = scalar_lea.vmem [#allocation5], 256
    %v251 = vld [vmem:[%s250] sm:$0xff]
    %v252 = vld [vmem:[%s250 + $0x8] sm:$0xff]
    %v253 = vld [vmem:[%s250 + $0x10] sm:$0xff]
    %v254 = vld [vmem:[%s250 + $0x18] sm:$0xff]
    %v255 = vld [vmem:[%s250 + $0x20] sm:$0xff]
    %v256 = vld [vmem:[%s250 + $0x28] sm:$0xff]
    %v257 = vld [vmem:[%s250 + $0x30] sm:$0xff]
    %v258 = vld [vmem:[%s250 + $0x38] sm:$0xff]
    %v259 = vld [vmem:[%s250 + $0x40] sm:$0xff]
    %v260 = vld [vmem:[%s250 + $0x48] sm:$0xff]
    %v261 = vld [vmem:[%s250 + $0x50] sm:$0xff]
    %v262 = vld [vmem:[%s250 + $0x58] sm:$0xff]
    %v263 = vld [vmem:[%s250 + $0x60] sm:$0xff]
    %v264 = vld [vmem:[%s250 + $0x68] sm:$0xff]
    %v265 = vld [vmem:[%s250 + $0x70] sm:$0xff]
    %v266 = vld [vmem:[%s250 + $0x78] sm:$0xff]
    %v267 = vld [vmem:[#allocation7 + $0x2] sm:$0x1]
    %v268 = vlaneseq
    %v269 = vshrl.u32 %v268, 7
    %v270 = vsub.s32 0, %v269
    %v271 = vrot.slane %v267, %v270
    %272 = vmatprep.subr.mxu0 0.0
    %273 = vmatpush1.msra.mxu0 %v251
    %274 = vmatprep.subr.mxu0 0.0
    %275 = vmatpush1.msra.mxu0 %v252
    %276 = vmatprep.subr.mxu0 0.0
    %277 = vmatpush1.msra.mxu0 %v253
    %278 = vmatprep.subr.mxu0 0.0
    %279 = vmatpush1.msra.mxu0 %v254
    %280 = vmatprep.subr.mxu0 0.0
    %281 = vmatpush1.msra.mxu0 %v255
    %282 = vmatprep.subr.mxu0 0.0
    %283 = vmatpush1.msra.mxu0 %v256
    %284 = vmatprep.subr.mxu0 0.0
    %285 = vmatpush1.msra.mxu0 %v257
    %286 = vmatprep.subr.mxu0 0.0
    %287 = vmatpush1.msra.mxu0 %v258
    %288 = vmatprep.subr.mxu0 0.0
    %289 = vmatpush1.msra.mxu0 %v259
    %290 = vmatprep.subr.mxu0 0.0
    %291 = vmatpush1.msra.mxu0 %v260
    %292 = vmatprep.subr.mxu0 0.0
    %293 = vmatpush1.msra.mxu0 %v261
    %294 = vmatprep.subr.mxu0 0.0
    %295 = vmatpush1.msra.mxu0 %v262
    %296 = vmatprep.subr.mxu0 0.0
    %297 = vmatpush1.msra.mxu0 %v263
    %298 = vmatprep.subr.mxu0 0.0
    %299 = vmatpush1.msra.mxu0 %v264
    %300 = vmatprep.subr.mxu0 0.0
    %301 = vmatpush1.msra.mxu0 %v265
    %302 = vmatprep.subr.mxu0 0.0
    %303 = vmatpush1.msra.mxu0 %v266
    %304 = vmatprep.subr.mxu0 0.0
    %305 = vmatpush1.msra.mxu0 0.0
    %306 = vmatprep.subr.mxu0 0.0
    %307 = vmatpush1.msra.mxu0 0.0
    %308 = vmatprep.subr.mxu0 0.0
    %309 = vmatpush1.msra.mxu0 0.0
    %310 = vmatprep.subr.mxu0 0.0
    %311 = vmatpush1.msra.mxu0 0.0
    %312 = vmatprep.subr.mxu0 0.0
    %313 = vmatpush1.msra.mxu0 0.0
    %314 = vmatprep.subr.mxu0 0.0
    %315 = vmatpush1.msra.mxu0 0.0
    %316 = vmatprep.subr.mxu0 0.0
    %317 = vmatpush1.msra.mxu0 0.0
    %318 = vmatprep.subr.mxu0 0.0
    %319 = vmatpush1.msra.mxu0 0.0
    %320 = vmatprep.subr.mxu0 0.0
    %321 = vmatpush1.msra.mxu0 0.0
    %322 = vmatprep.subr.mxu0 0.0
    %323 = vmatpush1.msra.mxu0 0.0
    %324 = vmatprep.subr.mxu0 0.0
    %325 = vmatpush1.msra.mxu0 0.0
    %326 = vmatprep.subr.mxu0 0.0
    %327 = vmatpush1.msra.mxu0 0.0
    %328 = vmatprep.subr.mxu0 0.0
    %329 = vmatpush1.msra.mxu0 0.0
    %330 = vmatprep.subr.mxu0 0.0
    %331 = vmatpush1.msra.mxu0 0.0
    %332 = vmatprep.subr.mxu0 0.0
    %333 = vmatpush1.msra.mxu0 0.0
    %334 = vmatprep.subr.mxu0 0.0
    %335 = vmatpush1.msra.mxu0 0.0
    %336 = vmatprep.mubr.f32.mxu0 0.0
    %337 = vmatmul.mubr.f32.gmra.mrb[0].mxu0 %v249
    %v338 = vpop.f32.mrb[0].mxu0
    %v339 = vadd.f32 %v271, %v338
    %v340 = vpop.f32.mrb[0].mxu0
    %341 = vdwg.mxu0
    %v342 = vmax.f32 %v339, 0.0
    %s343 = scalar_lea.vmem [#allocation5], 384
    %v344 = vld [vmem:[%s343] sm:$0xff]
    %v345 = vld [vmem:[%s343 + $0x8] sm:$0xff]
    %v346 = vld [vmem:[%s343 + $0x10] sm:$0xff]
    %v347 = vld [vmem:[%s343 + $0x18] sm:$0xff]
    %v348 = vld [vmem:[%s343 + $0x20] sm:$0xff]
    %v349 = vld [vmem:[%s343 + $0x28] sm:$0xff]
    %v350 = vld [vmem:[%s343 + $0x30] sm:$0xff]
    %v351 = vld [vmem:[%s343 + $0x38] sm:$0xff]
    %v352 = vld [vmem:[%s343 + $0x40] sm:$0xff]
    %v353 = vld [vmem:[%s343 + $0x48] sm:$0xff]
    %v354 = vld [vmem:[%s343 + $0x50] sm:$0xff]
    %v355 = vld [vmem:[%s343 + $0x58] sm:$0xff]
    %v356 = vld [vmem:[%s343 + $0x60] sm:$0xff]
    %v357 = vld [vmem:[%s343 + $0x68] sm:$0xff]
    %v358 = vld [vmem:[%s343 + $0x70] sm:$0xff]
    %v359 = vld [vmem:[%s343 + $0x78] sm:$0xff]
    %v360 = vld [vmem:[#allocation7 + $0x3] sm:$0x1]
    %v361 = vlaneseq
    %v362 = vshrl.u32 %v361, 7
    %v363 = vsub.s32 0, %v362
    %v364 = vrot.slane %v360, %v363
    %365 = vmatprep.subr.mxu0 0.0
    %366 = vmatpush1.msra.mxu0 %v344
    %367 = vmatprep.subr.mxu0 0.0
    %368 = vmatpush1.msra.mxu0 %v345
    %369 = vmatprep.subr.mxu0 0.0
    %370 = vmatpush1.msra.mxu0 %v346
    %371 = vmatprep.subr.mxu0 0.0
    %372 = vmatpush1.msra.mxu0 %v347
    %373 = vmatprep.subr.mxu0 0.0
    %374 = vmatpush1.msra.mxu0 %v348
    %375 = vmatprep.subr.mxu0 0.0
    %376 = vmatpush1.msra.mxu0 %v349
    %377 = vmatprep.subr.mxu0 0.0
    %378 = vmatpush1.msra.mxu0 %v350
    %379 = vmatprep.subr.mxu0 0.0
    %380 = vmatpush1.msra.mxu0 %v351
    %381 = vmatprep.subr.mxu0 0.0
    %382 = vmatpush1.msra.mxu0 %v352
    %383 = vmatprep.subr.mxu0 0.0
    %384 = vmatpush1.msra.mxu0 %v353
    %385 = vmatprep.subr.mxu0 0.0
    %386 = vmatpush1.msra.mxu0 %v354
    %387 = vmatprep.subr.mxu0 0.0
    %388 = vmatpush1.msra.mxu0 %v355
    %389 = vmatprep.subr.mxu0 0.0
    %390 = vmatpush1.msra.mxu0 %v356
    %391 = vmatprep.subr.mxu0 0.0
    %392 = vmatpush1.msra.mxu0 %v357
    %393 = vmatprep.subr.mxu0 0.0
    %394 = vmatpush1.msra.mxu0 %v358
    %395 = vmatprep.subr.mxu0 0.0
    %396 = vmatpush1.msra.mxu0 %v359
    %397 = vmatprep.subr.mxu0 0.0
    %398 = vmatpush1.msra.mxu0 0.0
    %399 = vmatprep.subr.mxu0 0.0
    %400 = vmatpush1.msra.mxu0 0.0
    %401 = vmatprep.subr.mxu0 0.0
    %402 = vmatpush1.msra.mxu0 0.0
    %403 = vmatprep.subr.mxu0 0.0
    %404 = vmatpush1.msra.mxu0 0.0
    %405 = vmatprep.subr.mxu0 0.0
    %406 = vmatpush1.msra.mxu0 0.0
    %407 = vmatprep.subr.mxu0 0.0
    %408 = vmatpush1.msra.mxu0 0.0
    %409 = vmatprep.subr.mxu0 0.0
    %410 = vmatpush1.msra.mxu0 0.0
    %411 = vmatprep.subr.mxu0 0.0
    %412 = vmatpush1.msra.mxu0 0.0
    %413 = vmatprep.subr.mxu0 0.0
    %414 = vmatpush1.msra.mxu0 0.0
    %415 = vmatprep.subr.mxu0 0.0
    %416 = vmatpush1.msra.mxu0 0.0
    %417 = vmatprep.subr.mxu0 0.0
    %418 = vmatpush1.msra.mxu0 0.0
    %419 = vmatprep.subr.mxu0 0.0
    %420 = vmatpush1.msra.mxu0 0.0
    %421 = vmatprep.subr.mxu0 0.0
    %422 = vmatpush1.msra.mxu0 0.0
    %423 = vmatprep.subr.mxu0 0.0
    %424 = vmatpush1.msra.mxu0 0.0
    %425 = vmatprep.subr.mxu0 0.0
    %426 = vmatpush1.msra.mxu0 0.0
    %427 = vmatprep.subr.mxu0 0.0
    %428 = vmatpush1.msra.mxu0 0.0
    %429 = vmatprep.mubr.f32.mxu0 0.0
    %430 = vmatmul.mubr.f32.gmra.mrb[0].mxu0 %v342
    %v431 = vpop.f32.mrb[0].mxu0
    %v432 = vadd.f32 %v364, %v431
    %v433 = vpop.f32.mrb[0].mxu0
    %434 = vdwg.mxu0
    %v435 = vmax.f32 %v432, 0.0
    %s436 = scalar_lea.vmem [#allocation5], 512
    %v437 = vld [vmem:[%s436] sm:$0xff]
    %v438 = vld [vmem:[%s436 + $0x8] sm:$0xff]
    %v439 = vld [vmem:[%s436 + $0x10] sm:$0xff]
    %v440 = vld [vmem:[%s436 + $0x18] sm:$0xff]
    %v441 = vld [vmem:[%s436 + $0x20] sm:$0xff]
    %v442 = vld [vmem:[%s436 + $0x28] sm:$0xff]
    %v443 = vld [vmem:[%s436 + $0x30] sm:$0xff]
    %v444 = vld [vmem:[%s436 + $0x38] sm:$0xff]
    %v445 = vld [vmem:[%s436 + $0x40] sm:$0xff]
    %v446 = vld [vmem:[%s436 + $0x48] sm:$0xff]
    %v447 = vld [vmem:[%s436 + $0x50] sm:$0xff]
    %v448 = vld [vmem:[%s436 + $0x58] sm:$0xff]
    %v449 = vld [vmem:[%s436 + $0x60] sm:$0xff]
    %v450 = vld [vmem:[%s436 + $0x68] sm:$0xff]
    %v451 = vld [vmem:[%s436 + $0x70] sm:$0xff]
    %v452 = vld [vmem:[%s436 + $0x78] sm:$0xff]
    %v453 = vld [vmem:[#allocation7 + $0x4] sm:$0x1]
    %v454 = vlaneseq
    %v455 = vshrl.u32 %v454, 7
    %v456 = vsub.s32 0, %v455
    %v457 = vrot.slane %v453, %v456
    %458 = vmatprep.subr.mxu0 0.0
    %459 = vmatpush1.msra.mxu0 %v437
    %460 = vmatprep.subr.mxu0 0.0
    %461 = vmatpush1.msra.mxu0 %v438
    %462 = vmatprep.subr.mxu0 0.0
    %463 = vmatpush1.msra.mxu0 %v439
    %464 = vmatprep.subr.mxu0 0.0
    %465 = vmatpush1.msra.mxu0 %v440
    %466 = vmatprep.subr.mxu0 0.0
    %467 = vmatpush1.msra.mxu0 %v441
    %468 = vmatprep.subr.mxu0 0.0
    %469 = vmatpush1.msra.mxu0 %v442
    %470 = vmatprep.subr.mxu0 0.0
    %471 = vmatpush1.msra.mxu0 %v443
    %472 = vmatprep.subr.mxu0 0.0
    %473 = vmatpush1.msra.mxu0 %v444
    %474 = vmatprep.subr.mxu0 0.0
    %475 = vmatpush1.msra.mxu0 %v445
    %476 = vmatprep.subr.mxu0 0.0
    %477 = vmatpush1.msra.mxu0 %v446
    %478 = vmatprep.subr.mxu0 0.0
    %479 = vmatpush1.msra.mxu0 %v447
    %480 = vmatprep.subr.mxu0 0.0
    %481 = vmatpush1.msra.mxu0 %v448
    %482 = vmatprep.subr.mxu0 0.0
    %483 = vmatpush1.msra.mxu0 %v449
    %484 = vmatprep.subr.mxu0 0.0
    %485 = vmatpush1.msra.mxu0 %v450
    %486 = vmatprep.subr.mxu0 0.0
    %487 = vmatpush1.msra.mxu0 %v451
    %488 = vmatprep.subr.mxu0 0.0
    %489 = vmatpush1.msra.mxu0 %v452
    %490 = vmatprep.subr.mxu0 0.0
    %491 = vmatpush1.msra.mxu0 0.0
    %492 = vmatprep.subr.mxu0 0.0
    %493 = vmatpush1.msra.mxu0 0.0
    %494 = vmatprep.subr.mxu0 0.0
    %495 = vmatpush1.msra.mxu0 0.0
    %496 = vmatprep.subr.mxu0 0.0
    %497 = vmatpush1.msra.mxu0 0.0
    %498 = vmatprep.subr.mxu0 0.0
    %499 = vmatpush1.msra.mxu0 0.0
    %500 = vmatprep.subr.mxu0 0.0
    %501 = vmatpush1.msra.mxu0 0.0
    %502 = vmatprep.subr.mxu0 0.0
    %503 = vmatpush1.msra.mxu0 0.0
    %504 = vmatprep.subr.mxu0 0.0
    %505 = vmatpush1.msra.mxu0 0.0
    %506 = vmatprep.subr.mxu0 0.0
    %507 = vmatpush1.msra.mxu0 0.0
    %508 = vmatprep.subr.mxu0 0.0
    %509 = vmatpush1.msra.mxu0 0.0
    %510 = vmatprep.subr.mxu0 0.0
    %511 = vmatpush1.msra.mxu0 0.0
    %512 = vmatprep.subr.mxu0 0.0
    %513 = vmatpush1.msra.mxu0 0.0
    %514 = vmatprep.subr.mxu0 0.0
    %515 = vmatpush1.msra.mxu0 0.0
    %516 = vmatprep.subr.mxu0 0.0
    %517 = vmatpush1.msra.mxu0 0.0
    %518 = vmatprep.subr.mxu0 0.0
    %519 = vmatpush1.msra.mxu0 0.0
    %520 = vmatprep.subr.mxu0 0.0
    %521 = vmatpush1.msra.mxu0 0.0
    %522 = vmatprep.mubr.f32.mxu0 0.0
    %523 = vmatmul.mubr.f32.gmra.mrb[0].mxu0 %v435
    %v524 = vpop.f32.mrb[0].mxu0
    %v525 = vadd.f32 %v457, %v524
    %v526 = vpop.f32.mrb[0].mxu0
    %527 = vdwg.mxu0
    %528 = vst [vmem:[#allocation8] sm:$0xff] %v525
    // Predicated region
    $region26: #{tpu_custom_call.1} parent=1 // pred_check
      _
    $region27: #{tpu_custom_call.1} parent=1 // pred_check_branch
      %530 = sbr.rel (0) target = $region29
    $region28: #{tpu_custom_call.1} parent=1 // pred_region
      %s532 = ssub.s32 128, 128
      %533 = vsyncadd [#allocation4], %s532
      %s535 = sshll.u32 [#allocation8], 4
      %s536 = int_to_ptr.vmem [resolvable:$true] %s535
      %538 = dma.vmem_to_hbm [thread:$0]  %s536, 128, %s3, [#allocation4]
    $region29: #{tpu_custom_call.1} parent=1 // pred_fallthru
      _
    // Predicated region
    $region30: #{tpu_custom_call.1} parent=1 // pred_check
      _
    $region31: #{tpu_custom_call.1} parent=1 // pred_check_branch
      %540 = sbr.rel (0) target = $region33
    $region32: #{tpu_custom_call.1} parent=1 // pred_region
      %541 = dma.done [#allocation4], 128
    $region33: #{tpu_custom_call.1} parent=1 // pred_fallthru
      _
    %542 = vsyncpa [#allocation3], 1
    %543 = vsyncpa [#allocation6], 1
    %544 = vsyncpa [#allocation4], 1

</llo_original>
